<compile_context>
chip_gen: v7x
topology: tpu7x:2x2x1
jax: 0.10.0
libtpu: 0.0.40
codegen_flags: <defaults>
</compile_context>

<pallas_src>
import math
from functools import partial

import jax
import jax.numpy as jnp
from jax.experimental import pallas as pl
from jax.experimental.pallas import tpu as pltpu

LN_EPS = 1e-12                      # HF BERT LayerNorm eps
_INV_SQRT2 = 0.7071067811865475
_SQRT_2_OVER_PI = 0.7978845608028654
_NEG_BIG = -1e30                    # finite "-inf" for the online softmax


# ----------------------- per-generation tuning knobs -----------------------

def _vmem_capacity_bytes():
    try:
        return int(pltpu.get_tpu_info().vmem_capacity_bytes)
    except Exception:
        return 64 << 20             # conservative (v7x-sized) fallback

_VMEM_CAP = _vmem_capacity_bytes()
_BIG_VMEM = _VMEM_CAP >= (96 << 20)                      # v5e / v6e (128 MiB)
_VMEM_LIMIT = (96 << 20) if _BIG_VMEM else (48 << 20)    # capped on v7x
_TM_MATMUL = 1024 if _BIG_VMEM else 512                  # amortize weight DMA


# ----------------------------- tiling helper --------------------------------

def _pick_tile(dim, target, align, min_steps=1):
    """Largest `align`-aligned tile <= target dividing `dim`.  With
    min_steps>1 the tile is additionally clamped so the axis gets at least
    that many grid steps (megacore).  Falls back to the full dim."""
    if min_steps > 1:
        target = min(target, max(align, dim // min_steps))
    if dim <= target or dim % align != 0:
        return dim
    t = (target // align) * align
    while t >= align:
        if dim % t == 0:
            return t
        t -= align
    return dim


# ----------------------------- GELU ------------------------------------------

_USE_ERF = None  # resolved lazily the first time a GELU kernel is built


def _erf_supported():
    def k(x_ref, o_ref):
        o_ref[...] = jax.lax.erf(x_ref[...])
    try:
        x = jnp.zeros((8, 128), jnp.float32)
        jax.block_until_ready(
            pl.pallas_call(k, out_shape=jax.ShapeDtypeStruct((8, 128),
                                                             jnp.float32))(x))
        return True
    except Exception:
        return False


def _gelu(h):
    if _USE_ERF:
        # exact erf-GELU (matches HF BERT); erf runs on the EUP slot
        return 0.5 * h * (1.0 + jax.lax.erf(h * _INV_SQRT2))
    # TODO(synk): tanh-approx fallback only when erf does not lower on this build.
    return 0.5 * h * (1.0 + jnp.tanh(_SQRT_2_OVER_PI * h * (1.0 + 0.044715 * h * h)))


# ----------------------------- Pallas kernels --------------------------------

def _linear_kernel(x_ref, w_ref, b_ref, o_ref, *, act):
    # Full-K contraction in one shot: no reduction grid axis, no accumulator.
    h = jnp.dot(x_ref[...], w_ref[...], preferred_element_type=jnp.float32)
    h = h + b_ref[...]                       # bias kept in f32
    if act == "gelu":
        h = _gelu(h)
    o_ref[...] = h.astype(o_ref.dtype)


def _linear_res_ln_kernel(x_ref, w_ref, b_ref, res_ref, g_ref, bb_ref, o_ref):
    # o = LayerNorm(x @ w + b + res) * gamma + beta   (full K and N resident)
    h = jnp.dot(x_ref[...], w_ref[...], preferred_element_type=jnp.float32)
    h = h + b_ref[...] + res_ref[...].astype(jnp.float32)
    n_inv = 1.0 / h.shape[-1]
    mean = jnp.sum(h, axis=-1, keepdims=True) * n_inv        # one fused pass:
    msq = jnp.sum(h * h, axis=-1, keepdims=True) * n_inv     # E[x], E[x^2]
    var = msq - mean * mean
    normed = (h - mean) * jax.lax.rsqrt(var + LN_EPS)
    o_ref[...] = (normed * g_ref[...] + bb_ref[...]).astype(o_ref.dtype)


def _layernorm_kernel(x_ref, g_ref, b_ref, o_ref):
    h = x_ref[...].astype(jnp.float32)
    n_inv = 1.0 / h.shape[-1]
    mean = jnp.sum(h, axis=-1, keepdims=True) * n_inv
    msq = jnp.sum(h * h, axis=-1, keepdims=True) * n_inv
    var = msq - mean * mean
    normed = (h - mean) * jax.lax.rsqrt(var + LN_EPS)
    o_ref[...] = (normed * g_ref[...] + b_ref[...]).astype(o_ref.dtype)


def _flash_attn_kernel(q_ref, k_ref, v_ref, mask_ref, o_ref,
                       m_sc, l_sc, acc_sc, *, scale):
    """Flash-style online softmax.  One (batch*head, q-tile) per outer grid
    step; the innermost grid axis streams KV tiles with running max/sum."""
    kv = pl.program_id(2)

    @pl.when(kv == 0)
    def _():
        m_sc[...] = jnp.full_like(m_sc, _NEG_BIG)
        l_sc[...] = jnp.zeros_like(l_sc)
        acc_sc[...] = jnp.zeros_like(acc_sc)

    q = q_ref[0]                              # (tq, Dh)  bf16
    k = k_ref[0]                              # (tkv, Dh) bf16
    v = v_ref[0]                              # (tkv, Dh) bf16
    bias = mask_ref[0]                        # (1, tkv)  f32 additive mask

    # contract on the last dims (no k.T) -> (tq, tkv) f32 scores
    s = jax.lax.dot_general(q, k, (((1,), (1,)), ((), ())),
                            preferred_element_type=jnp.float32)
    s = s * scale + bias

    m_prev = m_sc[...]
    m_new = jnp.maximum(m_prev, jnp.max(s, axis=-1, keepdims=True))
    alpha = jnp.exp(m_prev - m_new)
    p = jnp.exp(s - m_new)
    l_sc[...] = alpha * l_sc[...] + jnp.sum(p, axis=-1, keepdims=True)
    acc_sc[...] = alpha * acc_sc[...] + jnp.dot(p.astype(v.dtype), v,
                                                preferred_element_type=jnp.float32)
    m_sc[...] = m_new

    @pl.when(kv == pl.num_programs(2) - 1)
    def _():
        o_ref[0] = (acc_sc[...] *
                    pl.reciprocal(l_sc[...], approx=True)).astype(o_ref.dtype)


# ----------------------------- kernel wrappers --------------------------------

def linear(x, w, b, act=None, *, tn=256):
    global _USE_ERF
    if act == "gelu" and _USE_ERF is None:
        _USE_ERF = _erf_supported()
    M, K = x.shape
    N = w.shape[1]
    tm = _pick_tile(M, _TM_MATMUL, 8, min_steps=2)
    tn = _pick_tile(N, tn, 128)
    # TODO(synk): for very small M the weight DMA can become exposed; a
    # pipeline_mode=pl.Buffered(3) on the weight BlockSpec may help (sweep).
    return pl.pallas_call(
        partial(_linear_kernel, act=act),
        out_shape=jax.ShapeDtypeStruct((M, N), x.dtype),
        grid=(M // tm, N // tn),
        in_specs=[pl.BlockSpec((tm, K), lambda i, j: (i, 0)),
                  pl.BlockSpec((K, tn), lambda i, j: (0, j)),
                  pl.BlockSpec((1, tn), lambda i, j: (0, j))],
        out_specs=pl.BlockSpec((tm, tn), lambda i, j: (i, j)),
        compiler_params=pltpu.CompilerParams(
            dimension_semantics=("parallel", "parallel"),
            vmem_limit_bytes=_VMEM_LIMIT),
    )(x, w, b.reshape(1, N))


def linear_res_layernorm(x, w, b, res, gamma, beta):
    M, K = x.shape
    N = w.shape[1]                 # LayerNorm needs the full feature dim resident
    tm = _pick_tile(M, _TM_MATMUL, 8, min_steps=2)
    return pl.pallas_call(
        _linear_res_ln_kernel,
        out_shape=jax.ShapeDtypeStruct((M, N), x.dtype),
        grid=(M // tm,),
        in_specs=[pl.BlockSpec((tm, K), lambda i: (i, 0)),
                  pl.BlockSpec((K, N), lambda i: (0, 0)),
                  pl.BlockSpec((1, N), lambda i: (0, 0)),
                  pl.BlockSpec((tm, N), lambda i: (i, 0)),
                  pl.BlockSpec((1, N), lambda i: (0, 0)),
                  pl.BlockSpec((1, N), lambda i: (0, 0))],
        out_specs=pl.BlockSpec((tm, N), lambda i: (i, 0)),
        compiler_params=pltpu.CompilerParams(
            dimension_semantics=("parallel",),
            vmem_limit_bytes=_VMEM_LIMIT),
    )(x, w, b.reshape(1, N), res, gamma.reshape(1, N), beta.reshape(1, N))


def layernorm(x, gamma, beta, out_dtype=None):
    M, H = x.shape
    out_dtype = out_dtype or x.dtype
    tm = _pick_tile(M, _TM_MATMUL, 8, min_steps=2)
    return pl.pallas_call(
        _layernorm_kernel,
        out_shape=jax.ShapeDtypeStruct((M, H), out_dtype),
        grid=(M // tm,),
        in_specs=[pl.BlockSpec((tm, H), lambda i: (i, 0)),
                  pl.BlockSpec((1, H), lambda i: (0, 0)),
                  pl.BlockSpec((1, H), lambda i: (0, 0))],
        out_specs=pl.BlockSpec((tm, H), lambda i: (i, 0)),
        compiler_params=pltpu.CompilerParams(
            dimension_semantics=("parallel",),
            vmem_limit_bytes=_VMEM_LIMIT),
    )(x, gamma.reshape(1, H), beta.reshape(1, H))


def attention(qkv, attn_bias, *, B, S, H, NH, tq_target=256, tkv_target=512):
    """Flash self-attention fed from the fused (B*S, 3H) QKV slab.

    The slab is split into per-head (B*NH, S, Dh) Q/K/V tensors with a single
    XLA transpose (cheap vs. matmul weight streaming); each grid step handles
    one (batch*head, q-tile) and streams KV tiles with an online softmax so
    no (S,S) score matrix is ever materialized."""
    Dh = H // NH
    scale = 1.0 / math.sqrt(Dh)

    x = qkv.reshape(B, S, 3, NH, Dh)
    x = jnp.transpose(x, (2, 0, 3, 1, 4)).reshape(3, B * NH, S, Dh)
    q, k, v = x[0], x[1], x[2]

    tq = _pick_tile(S, tq_target, 8)
    tkv = _pick_tile(S, tkv_target, 128)
    grid = (B * NH, S // tq, S // tkv)

    out = pl.pallas_call(
        partial(_flash_attn_kernel, scale=scale),
        out_shape=jax.ShapeDtypeStruct((B * NH, S, Dh), qkv.dtype),
        grid=grid,
        in_specs=[
            pl.BlockSpec((1, tq, Dh), lambda bh, qi, kv: (bh, qi, 0)),
            pl.BlockSpec((1, tkv, Dh), lambda bh, qi, kv: (bh, kv, 0)),
            pl.BlockSpec((1, tkv, Dh), lambda bh, qi, kv: (bh, kv, 0)),
            pl.BlockSpec((1, 1, tkv), lambda bh, qi, kv: (bh // NH, 0, kv)),
        ],
        out_specs=pl.BlockSpec((1, tq, Dh), lambda bh, qi, kv: (bh, qi, 0)),
        scratch_shapes=[pltpu.VMEM((tq, 1), jnp.float32),     # running max
                        pltpu.VMEM((tq, 1), jnp.float32),     # running sum
                        pltpu.VMEM((tq, Dh), jnp.float32)],   # running ctx
        compiler_params=pltpu.CompilerParams(
            dimension_semantics=("parallel", "parallel", "arbitrary"),
            vmem_limit_bytes=_VMEM_LIMIT),
    )(q, k, v, attn_bias)

    # (B*NH, S, Dh) -> (B, S, NH*Dh) = (M, H)
    out = jnp.transpose(out.reshape(B, NH, S, Dh), (0, 2, 1, 3)).reshape(B * S, H)
    return out


# ----------------------------- BERT model (synthetic) -------------------------

def init_bert_params(key, cfg):
    H, I = cfg["hidden"], cfg["intermediate"]
    V, P, T = cfg["vocab"], cfg["max_pos"], cfg["type_vocab"]
    std = 0.02
    wdt = jnp.bfloat16   # matmul weights stored in bf16 (MXU-friendly, halves HBM)

    def nrm(k, shape, dtype=jnp.float32):
        return (jax.random.normal(k, shape, jnp.float32) * std).astype(dtype)

    keys = iter(jax.random.split(key, 4 + 5 * cfg["num_layers"]))
    params = {
        "word_emb": nrm(next(keys), (V, H)),
        "pos_emb": nrm(next(keys), (P, H)),
        "type_emb": nrm(next(keys), (T, H)),
        "emb_ln_g": jnp.ones((H,), jnp.float32),
        "emb_ln_b": jnp.zeros((H,), jnp.float32),
        "layers": [],
    }
    for _ in range(cfg["num_layers"]):
        params["layers"].append({
            "wqkv": nrm(next(keys), (H, 3 * H), wdt),   # packed [Q | K | V]
            "bqkv": jnp.zeros((3 * H,), jnp.float32),
            "wo": nrm(next(keys), (H, H), wdt),
            "bo": jnp.zeros((H,), jnp.float32),
            "ln1_g": jnp.ones((H,), jnp.float32),
            "ln1_b": jnp.zeros((H,), jnp.float32),
            "w1": nrm(next(keys), (H, I), wdt),
            "b1": jnp.zeros((I,), jnp.float32),
            "w2": nrm(next(keys), (I, H), wdt),
            "b2": jnp.zeros((H,), jnp.float32),
            "ln2_g": jnp.ones((H,), jnp.float32),
            "ln2_b": jnp.zeros((H,), jnp.float32),
        })
    return params


def bert_forward(params, input_ids, attention_mask, cfg):
    B, S = input_ids.shape
    H, NH = cfg["hidden"], cfg["num_heads"]
    M = B * S

    # --- embeddings (gathers are XLA glue; LayerNorm runs in Pallas) ---
    pos_ids = jnp.arange(S, dtype=jnp.int32)
    tok_type = jnp.zeros((B, S), jnp.int32)
    emb = (params["word_emb"][input_ids]
           + params["pos_emb"][pos_ids][None, :, :]
           + params["type_emb"][tok_type])
    x = layernorm(emb.reshape(M, H), params["emb_ln_g"], params["emb_ln_b"],
                  out_dtype=jnp.bfloat16)

    # HF-style extended additive attention mask, kept in f32 for the softmax
    attn_bias = ((1.0 - attention_mask.astype(jnp.float32)) * -10000.0
                 ).reshape(B, 1, S)

    for layer in params["layers"]:
        # fused QKV projection: one pass over x instead of three
        qkv = linear(x, layer["wqkv"], layer["bqkv"])                 # (M, 3H)
        ctx = attention(qkv, attn_bias, B=B, S=S, H=H, NH=NH)         # (M, H)
        # output projection fused with residual-add + LayerNorm
        x = linear_res_layernorm(ctx, layer["wo"], layer["bo"], x,
                                 layer["ln1_g"], layer["ln1_b"])
        # FFN: GELU fused into matmul-1, residual+LN fused into matmul-2
        h = linear(x, layer["w1"], layer["b1"], act="gelu")           # (M, I)
        x = linear_res_layernorm(h, layer["w2"], layer["b2"], x,
                                 layer["ln2_g"], layer["ln2_b"])

    hidden = x.reshape(B, S, H).astype(jnp.float32)
    # matches PyTorch: bert(...)[0].transpose(0, 1) -> (seq, batch, hidden)
    return jnp.transpose(hidden, (1, 0, 2))


# ----------------------------- main ------------------------------------------

if __name__ == "__main__":
    cfg = dict(vocab=100, hidden=32, num_heads=4, intermediate=64,
               num_layers=2, max_pos=16, type_vocab=2)

    key = jax.random.PRNGKey(0)
    k_params, k_ids = jax.random.split(key)

    B, S = 2, 8
    params = init_bert_params(k_params, cfg)
    input_ids = jax.random.randint(k_ids, (B, S), 0, cfg["vocab"], dtype=jnp.int32)
    attention_mask = jnp.ones((B, S), jnp.int32).at[1, 6:].set(0)  # pad sample 1 tail

    out = bert_forward(params, input_ids, attention_mask, cfg)
    out = jax.block_until_ready(out)

    assert out.shape == (S, B, cfg["hidden"]), out.shape
    assert bool(jnp.all(jnp.isfinite(out)))
    print("KERNEL_OK")
</pallas_src>

<mosaic_0001>
module attributes {stable_mosaic.version = 11 : i64} {
  func.func @_layernorm_kernel(%arg0: i32, %arg1: memref<8x32xf32, #tpu.memory_space<vmem>>, %arg2: memref<1x32xf32, #tpu.memory_space<vmem>>, %arg3: memref<1x32xf32, #tpu.memory_space<vmem>>, %arg4: memref<8x32xbf16, #tpu.memory_space<vmem>>) attributes {dimension_semantics = [#tpu.dimension_semantics<parallel>], iteration_bounds = array<i64: 2>, scalar_prefetch = 0 : i64, scratch_operands = 0 : i64, tpu.core_type = #tpu.core_type<tc>, window_params = [{transform_indices = @transform_0, window_bounds = array<i64: 8, 32>}, {pipeline_mode = #tpu.pipeline_mode<synchronous>, transform_indices = @transform_1, window_bounds = array<i64: 1, 32>}, {pipeline_mode = #tpu.pipeline_mode<synchronous>, transform_indices = @transform_2, window_bounds = array<i64: 1, 32>}, {transform_indices = @transform_3, window_bounds = array<i64: 8, 32>}]} {
    %c0 = arith.constant 0 : index
    %c0_0 = arith.constant 0 : index
    %0 = vector.load %arg1[%c0, %c0_0] : memref<8x32xf32, #tpu.memory_space<vmem>>, vector<8x32xf32>
    %cst = arith.constant dense<0.000000e+00> : vector<8xf32>
    %1 = vector.multi_reduction <add>, %0, %cst [1] : vector<8x32xf32> to vector<8xf32>
    %2 = vector.shape_cast %1 : vector<8xf32> to vector<8x1xf32>
    %cst_1 = arith.constant 3.125000e-02 : f32
    %3 = vector.broadcast %cst_1 : f32 to vector<8x1xf32>
    %4 = arith.mulf %2, %3 : vector<8x1xf32>
    %5 = arith.mulf %0, %0 : vector<8x32xf32>
    %cst_2 = arith.constant dense<0.000000e+00> : vector<8xf32>
    %6 = vector.multi_reduction <add>, %5, %cst_2 [1] : vector<8x32xf32> to vector<8xf32>
    %7 = vector.shape_cast %6 : vector<8xf32> to vector<8x1xf32>
    %cst_3 = arith.constant 3.125000e-02 : f32
    %8 = vector.broadcast %cst_3 : f32 to vector<8x1xf32>
    %9 = arith.mulf %7, %8 : vector<8x1xf32>
    %10 = arith.mulf %4, %4 : vector<8x1xf32>
    %11 = arith.subf %9, %10 : vector<8x1xf32>
    %12 = vector.broadcast %4 : vector<8x1xf32> to vector<8x32xf32>
    %13 = arith.subf %0, %12 : vector<8x32xf32>
    %cst_4 = arith.constant 9.99999996E-13 : f32
    %14 = vector.broadcast %cst_4 : f32 to vector<8x1xf32>
    %15 = arith.addf %11, %14 : vector<8x1xf32>
    %16 = math.rsqrt %15 : vector<8x1xf32>
    %17 = vector.broadcast %16 : vector<8x1xf32> to vector<8x32xf32>
    %18 = arith.mulf %13, %17 : vector<8x32xf32>
    %c0_5 = arith.constant 0 : index
    %c0_6 = arith.constant 0 : index
    %19 = vector.load %arg2[%c0_5, %c0_6] : memref<1x32xf32, #tpu.memory_space<vmem>>, vector<1x32xf32>
    %20 = vector.broadcast %19 : vector<1x32xf32> to vector<8x32xf32>
    %21 = arith.mulf %18, %20 : vector<8x32xf32>
    %c0_7 = arith.constant 0 : index
    %c0_8 = arith.constant 0 : index
    %22 = vector.load %arg3[%c0_7, %c0_8] : memref<1x32xf32, #tpu.memory_space<vmem>>, vector<1x32xf32>
    %23 = vector.broadcast %22 : vector<1x32xf32> to vector<8x32xf32>
    %24 = arith.addf %21, %23 : vector<8x32xf32>
    %25 = arith.truncf %24 : vector<8x32xf32> to vector<8x32xbf16>
    %c0_9 = arith.constant 0 : index
    %c0_10 = arith.constant 0 : index
    %26 = vector.load %arg4[%c0_9, %c0_10] : memref<8x32xbf16, #tpu.memory_space<vmem>>, vector<8x32xbf16>
    tpu.vector_store %arg4[%c0_9, %c0_10], %25 {strides = array<i32>} : memref<8x32xbf16, #tpu.memory_space<vmem>>, vector<8x32xbf16>,
    return
  }
  func.func @transform_0(%arg0: i32) -> (i32, i32) {
    %c0_i32 = arith.constant 0 : i32
    %c0_i32_0 = arith.constant 0 : i32
    return %arg0, %c0_i32 : i32, i32
  }
  func.func @transform_1(%arg0: i32) -> (i32, i32) {
    %c0_i32 = arith.constant 0 : i32
    %c0_i32_0 = arith.constant 0 : i32
    %c0_i32_1 = arith.constant 0 : i32
    return %c0_i32, %c0_i32_0 : i32, i32
  }
  func.func @transform_2(%arg0: i32) -> (i32, i32) {
    %c0_i32 = arith.constant 0 : i32
    %c0_i32_0 = arith.constant 0 : i32
    %c0_i32_1 = arith.constant 0 : i32
    return %c0_i32, %c0_i32_0 : i32, i32
  }
  func.func @transform_3(%arg0: i32) -> (i32, i32) {
    %c0_i32 = arith.constant 0 : i32
    %c0_i32_0 = arith.constant 0 : i32
    return %arg0, %c0_i32 : i32, i32
  }
}

</mosaic_0001>

<llo_original>
// kernel: tpu_custom_call.1
$region0: #{tpu_custom_call.1}
  #allocation0 [shape = 'u32[]', space=smem, size = 0x4, offset = 0x4, fixed_abs, tag = 'smem constant byte address 0x4 - core index']
  #allocation1 [shape = 'u32[144,128]{1,0:T(1,128)}', space=vmem, size = 0x12000, scoped, tag = 'internal scratch']
  %s0 = inlined_call_operand.hbm [shape: f32[16,32], index: 0, kind: input, shape index: {}]
  %s1 = inlined_call_operand.vmem [shape: f32[1,32], index: 1, kind: input, shape index: {}]
  %s2 = inlined_call_operand.vmem [shape: f32[1,32], index: 2, kind: input, shape index: {}]
  %s3 = inlined_call_operand.hbm [shape: bf16[16,32], index: 3, kind: output, shape index: {}]
  %s4 = sld [smem:[#allocation0]]
  $region49: #{tpu_custom_call.1} parent=0
    _
  %s6 = ssub.s32 1, %s4
  %s7 = scalar_select 0, %s6, %s4
  $region1: #{tpu_custom_call.1} parent=0
    #allocation2 [shape = 'u8[8192]{0}', space=vmem, size = 0x2000, scoped, tag = 'input window, operand 0']
    #allocation3 [shape = 's32[2]{0}', space=sflag, size = 0x8, scoped, tag = 'scoped memory for tpu_custom_call.1']
    #allocation4 [shape = 's32[2]{0}', space=sflag, size = 0x8, scoped, tag = 'scoped memory for tpu_custom_call.1']
    #allocation5 [shape = 'u8[4096]{0}', space=vmem, size = 0x1000, scoped, tag = 'output window, operand 0']
    %8 = vsyncpa [#allocation3], 0
    %s9 = scalar_lea.sflag [#allocation3], 1
    %10 = vsyncpa %s9, 0
    %11 = vsyncpa [#allocation4], 0
    %s12 = scalar_lea.sflag [#allocation4], 1
    %13 = vsyncpa %s12, 0
    loop: start=0, step=1, limit=4
    $region2: #{tpu_custom_call.1} parent=1 // loop_pre_header
      _
    $region3: #{tpu_custom_call.1} parent=1 // loop_header
      %s15 = sphi 0, %s19
      %p16 = scmp.ge.s32.totalorder %s15, 4
      %s25 = sphi 0, %s27
      %s28 = sphi 0, %s25
      %s29 = sphi 0, %s28
      %s45 = sphi 0, %s29
      %s49 = sphi 0, %s49
      %s51 = sphi 0, %s49
      %s52 = sphi 0, %s51
      %s66 = sphi 0, %s52
      %s70 = sphi 0, %s70
      %s72 = sphi 0, %s70
      %s73 = sphi 0, %s72
      %s87 = sphi 0, %s73
      %s93 = sphi 0, %s95
      %s96 = sphi 0, %s93
      %s97 = sphi 0, %s96
      %s113 = sphi 0, %s97
    $region4: #{tpu_custom_call.1} parent=1 // loop_header_branch
      %18 = sbr.rel (%p16) target = $region8
    $region5: #{tpu_custom_call.1} parent=1 // loop_body
      %s20 = ssub.s32 %s15, 1
      %s21 = ssub.s32 %s15, 2
      %s22 = sadd.s32 %s15, 1
      %s23 = ssub.s32 %s15, %s22
      %p24 = scmp.eq.s32.totalorder %s23, 0
      %s26 = sadd.s32 %s25, 1
      %s27 = scalar_select %p24, %s25, %s26
      %p30 = pneg %p24
      %p31 = scmp.eq.s32.totalorder %s15, 1
      %p32 = por %p30, %p31
      %p33 = scmp.ne.s32.totalorder %s25, %s28
      %p34 = scmp.eq.s32.totalorder %s15, 0
      %p35 = por %p33, %p34
      %p36 = scmp.ne.s32.totalorder %s25, %s28
      %p37 = scmp.eq.s32.totalorder %s20, 1
      %p38 = por %p36, %p37
      %p39 = scmp.ne.s32.totalorder %s28, %s29
      %p40 = scmp.eq.s32.totalorder %s20, 0
      %p41 = por %p39, %p40
      %p42 = scmp.ne.s32.totalorder %s28, %s29
      %p43 = scmp.eq.s32.totalorder %s21, 1
      %p44 = por %p42, %p43
      %p46 = scmp.ne.s32.totalorder %s29, %s45
      %p47 = scmp.eq.s32.totalorder %s21, 0
      %p48 = por %p46, %p47
      %s50 = sadd.s32 %s49, 1
      %p53 = scmp.eq.s32.totalorder %s15, 1
      %p54 = scmp.ne.s32.totalorder %s49, %s51
      %p55 = scmp.eq.s32.totalorder %s15, 0
      %p56 = por %p54, %p55
      %p57 = scmp.ne.s32.totalorder %s49, %s51
      %p58 = scmp.eq.s32.totalorder %s20, 1
      %p59 = por %p57, %p58
      %p60 = scmp.ne.s32.totalorder %s51, %s52
      %p61 = scmp.eq.s32.totalorder %s20, 0
      %p62 = por %p60, %p61
      %p63 = scmp.ne.s32.totalorder %s51, %s52
      %p64 = scmp.eq.s32.totalorder %s21, 1
      %p65 = por %p63, %p64
      %p67 = scmp.ne.s32.totalorder %s52, %s66
      %p68 = scmp.eq.s32.totalorder %s21, 0
      %p69 = por %p67, %p68
      %s71 = sadd.s32 %s70, 1
      %p74 = scmp.eq.s32.totalorder %s15, 1
      %p75 = scmp.ne.s32.totalorder %s70, %s72
      %p76 = scmp.eq.s32.totalorder %s15, 0
      %p77 = por %p75, %p76
      %p78 = scmp.ne.s32.totalorder %s70, %s72
      %p79 = scmp.eq.s32.totalorder %s20, 1
      %p80 = por %p78, %p79
      %p81 = scmp.ne.s32.totalorder %s72, %s73
      %p82 = scmp.eq.s32.totalorder %s20, 0
      %p83 = por %p81, %p82
      %p84 = scmp.ne.s32.totalorder %s72, %s73
      %p85 = scmp.eq.s32.totalorder %s21, 1
      %p86 = por %p84, %p85
      %p88 = scmp.ne.s32.totalorder %s73, %s87
      %p89 = scmp.eq.s32.totalorder %s21, 0
      %p90 = por %p88, %p89
      %s91 = ssub.s32 %s15, %s22
      %p92 = scmp.eq.s32.totalorder %s91, 0
      %s94 = sadd.s32 %s93, 1
      %s95 = scalar_select %p92, %s93, %s94
      %p98 = pneg %p92
      %p99 = scmp.eq.s32.totalorder %s15, 1
      %p100 = por %p98, %p99
      %p101 = scmp.ne.s32.totalorder %s93, %s96
      %p102 = scmp.eq.s32.totalorder %s15, 0
      %p103 = por %p101, %p102
      %p104 = scmp.ne.s32.totalorder %s93, %s96
      %p105 = scmp.eq.s32.totalorder %s20, 1
      %p106 = por %p104, %p105
      %p107 = scmp.ne.s32.totalorder %s96, %s97
      %p108 = scmp.eq.s32.totalorder %s20, 0
      %p109 = por %p107, %p108
      %p110 = scmp.ne.s32.totalorder %s96, %s97
      %p111 = scmp.eq.s32.totalorder %s21, 1
      %p112 = por %p110, %p111
      %p114 = scmp.ne.s32.totalorder %s97, %s113
      %p115 = scmp.eq.s32.totalorder %s21, 0
      %p116 = por %p114, %p115
      %p117 = scmp.le.s32.totalorder 1, %s15
      %p118 = scmp.lt.s32.totalorder %s15, 3
      %p119 = pnand %p117, %p118
      %p120 = pneg %p119
      // Predicated region
      $region9: #{tpu_custom_call.1} parent=5 // pred_check
        _
      $region10: #{tpu_custom_call.1} parent=5 // pred_check_branch
        %122 = sbr.rel (%p119) target = $region12
      $region11: #{tpu_custom_call.1} parent=5 // pred_region
        %s123 = ssub.s32 %s15, 1
        // Predicated region
        $region13: #{tpu_custom_call.1} parent=11 // pred_check
          %p124 = pneg %p62
        $region14: #{tpu_custom_call.1} parent=11 // pred_check_branch
          %126 = sbr.rel (%p124) target = $region16
        $region15: #{tpu_custom_call.1} parent=11 // pred_region
          _
        $region16: #{tpu_custom_call.1} parent=11 // pred_fallthru
          _
        // Predicated region
        $region17: #{tpu_custom_call.1} parent=11 // pred_check
          %p127 = pneg %p83
        $region18: #{tpu_custom_call.1} parent=11 // pred_check_branch
          %129 = sbr.rel (%p127) target = $region20
        $region19: #{tpu_custom_call.1} parent=11 // pred_region
          _
        $region20: #{tpu_custom_call.1} parent=11 // pred_fallthru
          _
      $region12: #{tpu_custom_call.1} parent=5 // pred_fallthru
        _
      %p130 = scmp.lt.s32.totalorder %s15, 2
      // Predicated region
      $region21: #{tpu_custom_call.1} parent=5 // pred_check
        %p131 = pneg %p130
      $region22: #{tpu_custom_call.1} parent=5 // pred_check_branch
        %133 = sbr.rel (%p131) target = $region24
      $region23: #{tpu_custom_call.1} parent=5 // pred_region
        // Predicated region
        $region25: #{tpu_custom_call.1} parent=23 // pred_check
          %p134 = pneg %p35
        $region26: #{tpu_custom_call.1} parent=23 // pred_check_branch
          %136 = sbr.rel (%p134) target = $region28
        $region27: #{tpu_custom_call.1} parent=23 // pred_region
          %s137 = sand.u32 %s25, 1
          %s138 = scalar_lea.sflag [#allocation3], %s137
          %s139 = sand.u32 %s25, 1
          %s140 = smul.addr %s139, 8
          %s141 = scalar_lea.vmem [#allocation2], %s140
          %s143 = ssub.s32 128, 128
          %144 = vsyncadd %s138, %s143
          %s145 = smul.addr %s15, 128
          %s146 = scalar_lea.hbm %s0, %s145
          %s148 = sshll.u32 %s141, 4
          %s149 = int_to_ptr.vmem [resolvable:$true] %s148
          %151 = dma.hbm_to_vmem [thread:$0]  %s146, 128, %s149, %s138
        $region28: #{tpu_custom_call.1} parent=23 // pred_fallthru
          _
      $region24: #{tpu_custom_call.1} parent=5 // pred_fallthru
        _
      %p152 = scmp.le.s32.totalorder 1, %s15
      %p153 = scmp.lt.s32.totalorder %s15, 3
      %p154 = pnand %p152, %p153
      %p155 = pneg %p154
      // Predicated region
      $region29: #{tpu_custom_call.1} parent=5 // pred_check
        _
      $region30: #{tpu_custom_call.1} parent=5 // pred_check_branch
        %157 = sbr.rel (%p154) target = $region32
      $region31: #{tpu_custom_call.1} parent=5 // pred_region
        %s158 = ssub.s32 %s15, 1
        %s159 = sand.u32 %s28, 1
        %s160 = scalar_lea.sflag [#allocation3], %s159
        %s161 = sand.u32 %s28, 1
        %s162 = smul.addr %s161, 8
        %s163 = scalar_lea.vmem [#allocation2], %s162
        // Predicated region
        $region33: #{tpu_custom_call.1} parent=31 // pred_check
          %p164 = pneg %p41
        $region34: #{tpu_custom_call.1} parent=31 // pred_check_branch
          %166 = sbr.rel (%p164) target = $region36
        $region35: #{tpu_custom_call.1} parent=31 // pred_region
          %167 = dma.done %s160, 128
        $region36: #{tpu_custom_call.1} parent=31 // pred_fallthru
          _
        %s168 = sand.u32 %s28, 1
        %s169 = scalar_lea.sflag [#allocation3], %s168
        %s170 = sand.u32 %s28, 1
        %s171 = smul.addr %s170, 8
        %s172 = scalar_lea.vmem [#allocation2], %s171
        %p173 = pneg %p41
        %p174 = pneg %p38
        %p175 = pneg %p62
        %p176 = pneg %p59
        %p177 = pneg %p83
        %p178 = pneg %p80
        %p179 = pneg %p109
        %p180 = pneg %p106
        %s181 = sand.u32 %s96, 1
        %s182 = scalar_lea.sflag [#allocation4], %s181
        %s183 = sand.u32 %s96, 1
        %s184 = smul.addr %s183, 4
        %s185 = scalar_lea.vmem [#allocation5], %s184
        %v186 = vld [vmem:[%s163] sm:$0xff]
        %vm187 = vcmask 261120
        %v188 = vsel %vm187, %v186, 0.0
        %189 = vadd.xlane.f32.xlu0 %v188
        %v190 = vpop.xlane.xlu0 %189
        %v191 = vmul.f32 %v190, 0.03125
        %v192 = vmul.f32 %v186, %v186
        %v193 = vsel %vm187, %v192, 0.0
        %194 = vadd.xlane.f32.xlu0 %v193
        %v195 = vpop.xlane.xlu0 %194
        %v196 = vmul.f32 %v195, 0.03125
        %v197 = vmul.f32 %v191, %v191
        %v198 = vsub.f32 %v196, %v197
        %v199 = vsub.f32 %v186, %v191
        %v200 = vadd.f32 %v198, 1e-12
        %v201 = vrsqrt.pop %v200
        %v202 = vmul.f32 %v199, %v201
        %v203 = vld [vmem:[%s1] sm:$0x1]
        %v205 = vlaneseq
        %v206 = vshrl.u32 %v205, 7
        %v207 = vsub.s32 0, %v206
        %v208 = vrot.slane %v203, %v207
        %v210 = vmul.f32 %v202, %v208
        %v211 = vld [vmem:[%s2] sm:$0x1]
        %v213 = vlaneseq
        %v214 = vshrl.u32 %v213, 7
        %v215 = vsub.s32 0, %v214
        %v216 = vrot.slane %v211, %v215
        %v218 = vadd.f32 %v210, %v216
        %v219 = vpack.c.bf16 %v218, %v218
        %vm220 = vcmask 257024
        %221 = vst.msk [vmem:[%s185] sm:$0xf] %vm220, %v219
        %s222 = sand.u32 %s96, 1
        %s223 = scalar_lea.sflag [#allocation4], %s222
        %s224 = sand.u32 %s96, 1
        %s225 = smul.addr %s224, 4
        %s226 = scalar_lea.vmem [#allocation5], %s225
        // Predicated region
        $region37: #{tpu_custom_call.1} parent=31 // pred_check
          %p227 = pneg %p106
        $region38: #{tpu_custom_call.1} parent=31 // pred_check_branch
          %229 = sbr.rel (%p227) target = $region40
        $region39: #{tpu_custom_call.1} parent=31 // pred_region
          %s231 = ssub.s32 64, 64
          %232 = vsyncadd %s223, %s231
          %s233 = smul.addr %s20, 64
          %s234 = scalar_lea.hbm %s3, %s233
          %s236 = sshll.u32 %s226, 4
          %s237 = int_to_ptr.vmem [resolvable:$true] %s236
          %239 = dma.vmem_to_hbm [thread:$0]  %s237, 64, %s234, %s223
        $region40: #{tpu_custom_call.1} parent=31 // pred_fallthru
          _
      $region32: #{tpu_custom_call.1} parent=5 // pred_fallthru
        _
      %p240 = scmp.le.s32.totalorder 2, %s15
      // Predicated region
      $region41: #{tpu_custom_call.1} parent=5 // pred_check
        %p241 = pneg %p240
      $region42: #{tpu_custom_call.1} parent=5 // pred_check_branch
        %243 = sbr.rel (%p241) target = $region44
      $region43: #{tpu_custom_call.1} parent=5 // pred_region
        %s244 = ssub.s32 %s15, 2
        // Predicated region
        $region45: #{tpu_custom_call.1} parent=43 // pred_check
          %p245 = pneg %p112
        $region46: #{tpu_custom_call.1} parent=43 // pred_check_branch
          %247 = sbr.rel (%p245) target = $region48
        $region47: #{tpu_custom_call.1} parent=43 // pred_region
          %s248 = sand.u32 %s97, 1
          %s249 = scalar_lea.sflag [#allocation4], %s248
          %s250 = sand.u32 %s97, 1
          %s251 = smul.addr %s250, 4
          %s252 = scalar_lea.vmem [#allocation5], %s251
          %253 = dma.done %s249, 64
        $region48: #{tpu_custom_call.1} parent=43 // pred_fallthru
          _
      $region44: #{tpu_custom_call.1} parent=5 // pred_fallthru
        _
    $region6: #{tpu_custom_call.1} parent=1 // loop_footer
      %s19 = sadd.s32 1, %s15
    $region7: #{tpu_custom_call.1} parent=1 // loop_footer_branch
      %14 = sbr.rel target = $region3
    $region8: #{tpu_custom_call.1} parent=1 // loop_exit
      _
    %254 = vsyncpa [#allocation3], 1
    %s255 = scalar_lea.sflag [#allocation3], 1
    %256 = vsyncpa %s255, 1
    %257 = vsyncpa [#allocation4], 1
    %s258 = scalar_lea.sflag [#allocation4], 1
    %259 = vsyncpa %s258, 1

</llo_original>
